<compile_context>
chip_gen: v5e
topology: v5e:2x2
jax: 0.10.0
libtpu: 0.0.40
codegen_flags: <defaults>
</compile_context>

<pallas_src>
import jax
import jax.numpy as jnp
from jax import lax
from jax.experimental import pallas as pl
from jax.experimental.pallas import tpu as pltpu


# --------------------------------------------------------------------------
# Kernels
# --------------------------------------------------------------------------
def _rowmask_kernel(x_ref, m_ref, o_ref):
    # (TILE, W) * (TILE, 1): per-row keep mask broadcast across lanes.
    # Multiply (not select) so NaN/Inf propagate exactly like the reference.
    o_ref[...] = x_ref[...] * m_ref[...]


def _make_fold_kernel(fold, d):
    """Kernel for D < 128 with 128 % D == 0: `fold` = 128 // D consecutive
    original rows are packed into one lane-dense kernel row of width fold*D
    (a multiple of 128 -> unmasked full-width stores).  The (TILE, fold) mask
    is expanded across each D-lane segment in-register."""

    def kernel(x_ref, m_ref, o_ref):
        x = x_ref[...]                                     # (TILE, fold*d)
        m = m_ref[...]                                     # (TILE, fold)
        grp = lax.broadcasted_iota(jnp.int32, x.shape, 1) // d
        mexp = jnp.zeros_like(x)
        for g in range(fold):                              # static unroll
            mexp = jnp.where(grp == g, m[:, g:g + 1], mexp)
        o_ref[...] = x * mexp

    return kernel


# --------------------------------------------------------------------------
# Tiling helpers
# --------------------------------------------------------------------------
def _vmem_capacity_bytes():
    try:
        return int(pltpu.get_tpu_info().vmem_capacity_bytes)
    except Exception:
        return 64 * 1024 * 1024          # conservative default (v7x per-TC)


def _choose_tile_rows(rows, row_bytes, pack, tile_bytes_target):
    """Pick a sublane-aligned row tile: big enough to amortize the ~0.35us
    per-step overhead, small enough to double-buffer in VMEM, and producing
    >= 2 (preferably an even number of) grid steps so both v7x TensorCores
    stream HBM."""
    if rows <= pack:
        return rows

    def align_up(v):
        return -(-v // pack) * pack

    budget = (tile_bytes_target // max(row_bytes, 1)) // pack * pack
    budget = max(pack, budget)
    # At least two grid steps (v7x has 2 TCs; the extra step is noise on
    # single-TC v5e/v6e).
    tile = min(budget, align_up(pl.cdiv(rows, 2)))
    tile = max(pack, min(tile, rows))
    # Prefer an even step count for 2:2 core balance on v7x.
    steps = pl.cdiv(rows, tile)
    if steps > 1 and steps % 2 == 1:
        alt = max(pack, align_up(pl.cdiv(rows, steps + 1)))
        if 0 < alt < rows and pl.cdiv(rows, alt) % 2 == 0:
            tile = alt
    return tile


def _row_spec(tile, width, deep):
    """Row-tile BlockSpec; optionally 3-deep pipelined for small tiles so the
    DMA engine stays ahead of the VPU (only matters on long, small-tile
    grids, e.g. after the v7x 2-TC split)."""
    idx = lambda i: (i, 0)
    if deep and hasattr(pl, "Buffered"):
        try:
            return pl.BlockSpec((tile, width), idx, pipeline_mode=pl.Buffered(3))
        except TypeError:
            pass
    return pl.BlockSpec((tile, width), idx)


# --------------------------------------------------------------------------
# Wrapper
# --------------------------------------------------------------------------
def random_drop(x, key, *, drop_prob, num_skip, training=False, donate_x=False):
    """JAX/Pallas equivalent of RandomDrop.forward."""
    if not training:
        # Eval path is the identity (reference returns x unchanged).
        return x

    B, N, D = x.shape
    rows = B * N
    keep_prob = 1.0 - float(drop_prob)

    # Per-(batch, token) keep mask: floor(keep_prob + U[0,1)) in {0, 1},
    # forced to 1 for token index < num_skip.  No 1/keep_prob rescaling
    # (matches the PyTorch reference).
    u = jax.random.uniform(key, (rows,), dtype=jnp.float32)
    keep = jnp.floor(keep_prob + u)
    tok = jnp.arange(rows, dtype=jnp.int32) % N
    keep = jnp.where(tok < num_skip, jnp.float32(1.0), keep).astype(x.dtype)

    itemsize = jnp.dtype(x.dtype).itemsize
    pack = max(8, 32 // itemsize)        # sublane pack: f32->8, bf16->16, i8->32

    # Chip-aware VMEM budgets (2x in + 2x out double buffers + tiny mask).
    vmem_cap = _vmem_capacity_bytes()
    if vmem_cap >= 96 * 1024 * 1024:     # v5e / v6e: 128 MiB physical VMEM
        tile_bytes_target = 8 * 1024 * 1024
        vmem_limit = 64 * 1024 * 1024
    else:                                # v7x: 64 MiB per TensorCore
        tile_bytes_target = 6 * 1024 * 1024
        vmem_limit = 48 * 1024 * 1024

    # Choose a lane-dense layout for the kernel.
    if D % 128 == 0:
        kernel = _rowmask_kernel
        x2 = x.reshape(rows, D)
        m2 = keep.reshape(rows, 1)
        krows, kcols, mcols = rows, D, 1
    elif D < 128 and 128 % D == 0 and rows % (128 // D) == 0:
        fold = 128 // D
        kernel = _make_fold_kernel(fold, D)
        x2 = x.reshape(rows // fold, fold * D)        # contiguous -> free
        m2 = keep.reshape(rows // fold, fold)
        krows, kcols, mcols = rows // fold, fold * D, fold
    else:
        # TODO(synk): pad D up to a multiple of 128 for unmasked stores; the
        # fallback is correct and HBM-traffic-optimal but uses masked vst.
        kernel = _rowmask_kernel
        x2 = x.reshape(rows, D)
        m2 = keep.reshape(rows, 1)
        krows, kcols, mcols = rows, D, 1

    tile = _choose_tile_rows(krows, kcols * itemsize, pack, tile_bytes_target)
    grid = (pl.cdiv(krows, tile),)
    deep = (tile * kcols * itemsize < 512 * 1024) and grid[0] >= 4

    out = pl.pallas_call(
        kernel,
        out_shape=jax.ShapeDtypeStruct((krows, kcols), x.dtype),
        grid=grid,
        in_specs=[
            _row_spec(tile, kcols, deep),                 # x tile
            pl.BlockSpec((tile, mcols), lambda i: (i, 0)),  # per-row keep mask
        ],
        out_specs=_row_spec(tile, kcols, deep),
        input_output_aliases=({0: 0} if donate_x else {}),
        compiler_params=pltpu.CompilerParams(
            # Row tiles are independent -> shard the grid across both TCs on v7x.
            dimension_semantics=("parallel",),
            vmem_limit_bytes=vmem_limit,
        ),
    )(x2, m2)
    return out.reshape(B, N, D)


# --------------------------------------------------------------------------
# Demo / sanity checks
# --------------------------------------------------------------------------
if __name__ == "__main__":
    root = jax.random.PRNGKey(0)
    kx_a, kx_b, kmask = jax.random.split(root, 3)

    drop_prob = 0.3
    num_skip = 4

    def _check(x, y):
        assert y.shape == x.shape and y.dtype == x.dtype
        # First num_skip tokens are untouched in training mode.
        assert bool(jnp.allclose(y[:, :num_skip, :], x[:, :num_skip, :]))
        # Remaining tokens are either kept exactly or zeroed (per-token mask).
        ti, to = x[:, num_skip:, :], y[:, num_skip:, :]
        kept_or_zero = jnp.logical_or(
            jnp.all(jnp.isclose(to, ti), axis=-1),
            jnp.all(to == 0.0, axis=-1),
        )
        assert bool(jnp.all(kept_or_zero))

    # Case A: production-like lane-dense feature dim (D % 128 == 0).
    B, N, D = 2, 16, 128
    xa = jax.random.normal(kx_a, (B, N, D), dtype=jnp.float32)
    ya = jax.block_until_ready(
        random_drop(xa, kmask, drop_prob=drop_prob, num_skip=num_skip,
                    training=True))
    _check(xa, ya)

    # Case B: small feature dim (D = 32) exercising the folded lane-dense path.
    Db = 32
    xb = jax.random.normal(kx_b, (B, N, Db), dtype=jnp.float32)
    yb = jax.block_until_ready(
        random_drop(xb, kmask, drop_prob=drop_prob, num_skip=num_skip,
                    training=True))
    _check(xb, yb)

    # Eval path is the identity.
    ye = jax.block_until_ready(
        random_drop(xa, kmask, drop_prob=drop_prob, num_skip=num_skip,
                    training=False))
    assert bool(jnp.array_equal(ye, xa))

    print("KERNEL_OK")
</pallas_src>

<mosaic_0001>
module attributes {stable_mosaic.version = 11 : i64} {
  func.func @_rowmask_kernel(%arg0: i32, %arg1: memref<16x128xf32, #tpu.memory_space<vmem>>, %arg2: memref<16x1xf32, #tpu.memory_space<vmem>>, %arg3: memref<16x128xf32, #tpu.memory_space<vmem>>) attributes {dimension_semantics = [#tpu.dimension_semantics<parallel>], iteration_bounds = array<i64: 2>, scalar_prefetch = 0 : i64, scratch_operands = 0 : i64, tpu.core_type = #tpu.core_type<tc>, window_params = [{transform_indices = @transform_0, window_bounds = array<i64: 16, 128>}, {transform_indices = @transform_1, window_bounds = array<i64: 16, 1>}, {transform_indices = @transform_2, window_bounds = array<i64: 16, 128>}]} {
    %c0 = arith.constant 0 : index
    %c0_0 = arith.constant 0 : index
    %0 = vector.load %arg1[%c0, %c0_0] : memref<16x128xf32, #tpu.memory_space<vmem>>, vector<16x128xf32>
    %c0_1 = arith.constant 0 : index
    %c0_2 = arith.constant 0 : index
    %1 = vector.load %arg2[%c0_1, %c0_2] : memref<16x1xf32, #tpu.memory_space<vmem>>, vector<16x1xf32>
    %2 = vector.broadcast %1 : vector<16x1xf32> to vector<16x128xf32>
    %3 = arith.mulf %0, %2 : vector<16x128xf32>
    %c0_3 = arith.constant 0 : index
    %c0_4 = arith.constant 0 : index
    %4 = vector.load %arg3[%c0_3, %c0_4] : memref<16x128xf32, #tpu.memory_space<vmem>>, vector<16x128xf32>
    tpu.vector_store %arg3[%c0_3, %c0_4], %3 {strides = array<i32>} : memref<16x128xf32, #tpu.memory_space<vmem>>, vector<16x128xf32>,
    return
  }
  func.func @transform_0(%arg0: i32) -> (i32, i32) {
    %c0_i32 = arith.constant 0 : i32
    %c0_i32_0 = arith.constant 0 : i32
    return %arg0, %c0_i32 : i32, i32
  }
  func.func @transform_1(%arg0: i32) -> (i32, i32) {
    %c0_i32 = arith.constant 0 : i32
    %c0_i32_0 = arith.constant 0 : i32
    return %arg0, %c0_i32 : i32, i32
  }
  func.func @transform_2(%arg0: i32) -> (i32, i32) {
    %c0_i32 = arith.constant 0 : i32
    %c0_i32_0 = arith.constant 0 : i32
    return %arg0, %c0_i32 : i32, i32
  }
}

</mosaic_0001>

<llo_original>
// kernel: tpu_custom_call.1
$region0: #{tpu_custom_call.1}
  #allocation0 [shape = 'u32[]', space=smem, size = 0x4, offset = 0x4, fixed_abs, tag = 'smem constant byte address 0x4 - core index']
  #allocation1 [shape = 'u32[72,128]{1,0:T(1,128)}', space=vmem, size = 0x9000, scoped, tag = 'internal scratch']
  %s0 = inlined_call_operand.vmem [shape: f32[32,128], index: 0, kind: input, shape index: {}]
  %s1 = inlined_call_operand.vmem [shape: f32[32,1], index: 1, kind: input, shape index: {}]
  %s2 = inlined_call_operand.hbm [shape: f32[32,128], index: 2, kind: output, shape index: {}]
  %s3 = sld [smem:[#allocation0]]
  $region41: #{tpu_custom_call.1} parent=0
    _
  %s5 = ssub.s32 1, %s3
  %s6 = scalar_select 0, %s5, %s3
  $region1: #{tpu_custom_call.1} parent=0
    #allocation2 [shape = 'u8[16384]{0}', space=vmem, size = 0x4000, scoped, tag = 'output window, operand 0']
    #allocation3 [shape = 's32[2]{0}', space=sflag, size = 0x8, scoped, tag = 'scoped memory for tpu_custom_call.1']
    %7 = vsyncpa [#allocation3], 0
    %s8 = scalar_lea.sflag [#allocation3], 1
    %9 = vsyncpa %s8, 0
    loop: start=0, step=1, limit=4
    $region2: #{tpu_custom_call.1} parent=1 // loop_pre_header
      _
    $region3: #{tpu_custom_call.1} parent=1 // loop_header
      %s11 = sphi 0, %s15
      %p12 = scmp.ge.s32.totalorder %s11, 4
      %s21 = sphi 0, %s23
      %s24 = sphi 0, %s21
      %s25 = sphi 0, %s24
      %s41 = sphi 0, %s25
      %s47 = sphi 0, %s49
      %s50 = sphi 0, %s47
      %s51 = sphi 0, %s50
      %s67 = sphi 0, %s51
      %s73 = sphi 0, %s75
      %s76 = sphi 0, %s73
      %s77 = sphi 0, %s76
      %s93 = sphi 0, %s77
    $region4: #{tpu_custom_call.1} parent=1 // loop_header_branch
      %14 = sbr.rel (%p12) target = $region8
    $region5: #{tpu_custom_call.1} parent=1 // loop_body
      %s16 = ssub.s32 %s11, 1
      %s17 = ssub.s32 %s11, 2
      %s18 = sadd.s32 %s11, 1
      %s19 = ssub.s32 %s11, %s18
      %p20 = scmp.eq.s32.totalorder %s19, 0
      %s22 = sadd.s32 %s21, 1
      %s23 = scalar_select %p20, %s21, %s22
      %p26 = pneg %p20
      %p27 = scmp.eq.s32.totalorder %s11, 1
      %p28 = por %p26, %p27
      %p29 = scmp.ne.s32.totalorder %s21, %s24
      %p30 = scmp.eq.s32.totalorder %s11, 0
      %p31 = por %p29, %p30
      %p32 = scmp.ne.s32.totalorder %s21, %s24
      %p33 = scmp.eq.s32.totalorder %s16, 1
      %p34 = por %p32, %p33
      %p35 = scmp.ne.s32.totalorder %s24, %s25
      %p36 = scmp.eq.s32.totalorder %s16, 0
      %p37 = por %p35, %p36
      %p38 = scmp.ne.s32.totalorder %s24, %s25
      %p39 = scmp.eq.s32.totalorder %s17, 1
      %p40 = por %p38, %p39
      %p42 = scmp.ne.s32.totalorder %s25, %s41
      %p43 = scmp.eq.s32.totalorder %s17, 0
      %p44 = por %p42, %p43
      %s45 = ssub.s32 %s11, %s18
      %p46 = scmp.eq.s32.totalorder %s45, 0
      %s48 = sadd.s32 %s47, 1
      %s49 = scalar_select %p46, %s47, %s48
      %p52 = pneg %p46
      %p53 = scmp.eq.s32.totalorder %s11, 1
      %p54 = por %p52, %p53
      %p55 = scmp.ne.s32.totalorder %s47, %s50
      %p56 = scmp.eq.s32.totalorder %s11, 0
      %p57 = por %p55, %p56
      %p58 = scmp.ne.s32.totalorder %s47, %s50
      %p59 = scmp.eq.s32.totalorder %s16, 1
      %p60 = por %p58, %p59
      %p61 = scmp.ne.s32.totalorder %s50, %s51
      %p62 = scmp.eq.s32.totalorder %s16, 0
      %p63 = por %p61, %p62
      %p64 = scmp.ne.s32.totalorder %s50, %s51
      %p65 = scmp.eq.s32.totalorder %s17, 1
      %p66 = por %p64, %p65
      %p68 = scmp.ne.s32.totalorder %s51, %s67
      %p69 = scmp.eq.s32.totalorder %s17, 0
      %p70 = por %p68, %p69
      %s71 = ssub.s32 %s11, %s18
      %p72 = scmp.eq.s32.totalorder %s71, 0
      %s74 = sadd.s32 %s73, 1
      %s75 = scalar_select %p72, %s73, %s74
      %p78 = pneg %p72
      %p79 = scmp.eq.s32.totalorder %s11, 1
      %p80 = por %p78, %p79
      %p81 = scmp.ne.s32.totalorder %s73, %s76
      %p82 = scmp.eq.s32.totalorder %s11, 0
      %p83 = por %p81, %p82
      %p84 = scmp.ne.s32.totalorder %s73, %s76
      %p85 = scmp.eq.s32.totalorder %s16, 1
      %p86 = por %p84, %p85
      %p87 = scmp.ne.s32.totalorder %s76, %s77
      %p88 = scmp.eq.s32.totalorder %s16, 0
      %p89 = por %p87, %p88
      %p90 = scmp.ne.s32.totalorder %s76, %s77
      %p91 = scmp.eq.s32.totalorder %s17, 1
      %p92 = por %p90, %p91
      %p94 = scmp.ne.s32.totalorder %s77, %s93
      %p95 = scmp.eq.s32.totalorder %s17, 0
      %p96 = por %p94, %p95
      %p97 = scmp.le.s32.totalorder 1, %s11
      %p98 = scmp.lt.s32.totalorder %s11, 3
      %p99 = pnand %p97, %p98
      %p100 = pneg %p99
      // Predicated region
      $region9: #{tpu_custom_call.1} parent=5 // pred_check
        _
      $region10: #{tpu_custom_call.1} parent=5 // pred_check_branch
        %102 = sbr.rel (%p99) target = $region12
      $region11: #{tpu_custom_call.1} parent=5 // pred_region
        %s103 = ssub.s32 %s11, 1
      $region12: #{tpu_custom_call.1} parent=5 // pred_fallthru
        _
      %p104 = scmp.lt.s32.totalorder %s11, 2
      // Predicated region
      $region13: #{tpu_custom_call.1} parent=5 // pred_check
        %p105 = pneg %p104
      $region14: #{tpu_custom_call.1} parent=5 // pred_check_branch
        %107 = sbr.rel (%p105) target = $region16
      $region15: #{tpu_custom_call.1} parent=5 // pred_region
        // Predicated region
        $region17: #{tpu_custom_call.1} parent=15 // pred_check
          %p108 = pneg %p31
        $region18: #{tpu_custom_call.1} parent=15 // pred_check_branch
          %110 = sbr.rel (%p108) target = $region20
        $region19: #{tpu_custom_call.1} parent=15 // pred_region
          %s111 = smul.u32 2, %s11
          %p112 = scmp.lt.s32.totalorder %s111, 3
          %s113 = scalar_select %p112, %s111, 3
          %s114 = smul.addr %s113, 8
          %s115 = scalar_lea.vmem %s0, %s114
          %s116 = smul.u32 2, %s11
        $region20: #{tpu_custom_call.1} parent=15 // pred_fallthru
          _
        // Predicated region
        $region21: #{tpu_custom_call.1} parent=15 // pred_check
          %p117 = pneg %p57
        $region22: #{tpu_custom_call.1} parent=15 // pred_check_branch
          %119 = sbr.rel (%p117) target = $region24
        $region23: #{tpu_custom_call.1} parent=15 // pred_region
          %s120 = smul.u32 2, %s11
          %p121 = scmp.lt.s32.totalorder %s120, 3
          %s122 = scalar_select %p121, %s120, 3
          %s123 = smul.addr %s122, 8
          %s124 = scalar_lea.vmem %s1, %s123
          %s125 = smul.u32 2, %s11
        $region24: #{tpu_custom_call.1} parent=15 // pred_fallthru
          _
      $region16: #{tpu_custom_call.1} parent=5 // pred_fallthru
        _
      %p126 = scmp.le.s32.totalorder 1, %s11
      %p127 = scmp.lt.s32.totalorder %s11, 3
      %p128 = pnand %p126, %p127
      %p129 = pneg %p128
      // Predicated region
      $region25: #{tpu_custom_call.1} parent=5 // pred_check
        _
      $region26: #{tpu_custom_call.1} parent=5 // pred_check_branch
        %131 = sbr.rel (%p128) target = $region28
      $region27: #{tpu_custom_call.1} parent=5 // pred_region
        %s132 = ssub.s32 %s11, 1
        %s133 = smul.u32 2, %s16
        %p134 = scmp.lt.s32.totalorder %s133, 3
        %s135 = scalar_select %p134, %s133, 3
        %s136 = smul.addr %s135, 8
        %s137 = scalar_lea.vmem %s0, %s136
        %p138 = pneg %p37
        %p139 = pneg %p34
        %s140 = smul.u32 2, %s16
        %p141 = scmp.lt.s32.totalorder %s140, 3
        %s142 = scalar_select %p141, %s140, 3
        %s143 = smul.addr %s142, 8
        %s144 = scalar_lea.vmem %s1, %s143
        %p145 = pneg %p63
        %p146 = pneg %p60
        %p147 = pneg %p89
        %p148 = pneg %p86
        %s149 = sand.u32 %s76, 1
        %s150 = scalar_lea.sflag [#allocation3], %s149
        %s151 = sand.u32 %s76, 1
        %s152 = smul.addr %s151, 16
        %s153 = scalar_lea.vmem [#allocation2], %s152
        %s154 = smul.u32 2, %s16
        %p155 = scmp.lt.s32.totalorder %s154, 3
        %s156 = scalar_select %p155, %s154, 3
        %s157 = smul.addr %s156, 8
        %s158 = scalar_lea.vmem %s0, %s157
        %s159 = smul.u32 2, %s16
        %s160 = smul.u32 2, %s16
        %p161 = scmp.lt.s32.totalorder %s160, 3
        %s162 = scalar_select %p161, %s160, 3
        %s163 = smul.addr %s162, 8
        %s164 = scalar_lea.vmem %s1, %s163
        %s165 = smul.u32 2, %s16
        %s166 = smul.u32 2, %s16
        %v167 = vld [vmem:[%s158] sm:$0xff]
        %v168 = vld [vmem:[%s158 + $0x8] sm:$0xff]
        %v169 = vld [vmem:[%s164] sm:$0xff]
        %v170 = vld [vmem:[%s164 + $0x8] sm:$0xff]
        %172 = vset.pattern.permute.xlu0 0
        %173 = vperm.xlu0 %172, %v169
        %v174 = vpop.permute.xlu0 %173
        %177 = vset.pattern.permute.xlu0 0
        %178 = vperm.xlu0 %177, %v170
        %v179 = vpop.permute.xlu0 %178
        %v181 = vmul.f32 %v167, %v174
        %v182 = vmul.f32 %v168, %v179
        %183 = vst [vmem:[%s153] sm:$0xff] %v181
        %184 = vst [vmem:[%s153 + $0x8] sm:$0xff] %v182
        %s185 = sand.u32 %s76, 1
        %s186 = scalar_lea.sflag [#allocation3], %s185
        %s187 = sand.u32 %s76, 1
        %s188 = smul.addr %s187, 16
        %s189 = scalar_lea.vmem [#allocation2], %s188
        // Predicated region
        $region29: #{tpu_custom_call.1} parent=27 // pred_check
          %p190 = pneg %p86
        $region30: #{tpu_custom_call.1} parent=27 // pred_check_branch
          %192 = sbr.rel (%p190) target = $region32
        $region31: #{tpu_custom_call.1} parent=27 // pred_region
          %s193 = smul.u32 2, %s16
          %195 = vsyncadd %s186, 0
          %s196 = smul.addr %s193, 8
          %s197 = scalar_lea.hbm %s2, %s196
          %s198 = sshll.u32 %s189, 4
          %s199 = int_to_ptr.vmem [resolvable:$true] %s198
          %s200 = sshll.u32 %s197, 4
          %s201 = int_to_ptr.hbm [resolvable:$true] %s200
          %206 = dma.vmem_to_hbm [thread:$0]  %s199, 256, %s201, %s186, 128, 128, 8
        $region32: #{tpu_custom_call.1} parent=27 // pred_fallthru
          _
      $region28: #{tpu_custom_call.1} parent=5 // pred_fallthru
        _
      %p207 = scmp.le.s32.totalorder 2, %s11
      // Predicated region
      $region33: #{tpu_custom_call.1} parent=5 // pred_check
        %p208 = pneg %p207
      $region34: #{tpu_custom_call.1} parent=5 // pred_check_branch
        %210 = sbr.rel (%p208) target = $region36
      $region35: #{tpu_custom_call.1} parent=5 // pred_region
        %s211 = ssub.s32 %s11, 2
        // Predicated region
        $region37: #{tpu_custom_call.1} parent=35 // pred_check
          %p212 = pneg %p92
        $region38: #{tpu_custom_call.1} parent=35 // pred_check_branch
          %214 = sbr.rel (%p212) target = $region40
        $region39: #{tpu_custom_call.1} parent=35 // pred_region
          %s215 = sand.u32 %s77, 1
          %s216 = scalar_lea.sflag [#allocation3], %s215
          %s217 = sand.u32 %s77, 1
          %s218 = smul.addr %s217, 16
          %s219 = scalar_lea.vmem [#allocation2], %s218
          %221 = dma.done %s216, 256
        $region40: #{tpu_custom_call.1} parent=35 // pred_fallthru
          _
      $region36: #{tpu_custom_call.1} parent=5 // pred_fallthru
        _
    $region6: #{tpu_custom_call.1} parent=1 // loop_footer
      %s15 = sadd.s32 1, %s11
    $region7: #{tpu_custom_call.1} parent=1 // loop_footer_branch
      %10 = sbr.rel target = $region3
    $region8: #{tpu_custom_call.1} parent=1 // loop_exit
      _
    %222 = vsyncpa [#allocation3], 1
    %s223 = scalar_lea.sflag [#allocation3], 1
    %224 = vsyncpa %s223, 1

</llo_original>
